<compile_context>
chip_gen: v5e
topology: v5e:2x2
jax: 0.10.0
libtpu: 0.0.40
codegen_flags: <defaults>
</compile_context>

<pallas_src>
import jax
import jax.numpy as jnp
from jax import lax
from jax.experimental import pallas as pl
from jax.experimental.pallas import tpu as pltpu

# ---- deterministic "parameters" (cfg.TRAIN defaults) ------------------------
BBOX_NORMALIZE_MEANS = (0.0, 0.0, 0.0, 0.0)
BBOX_NORMALIZE_STDS = (0.1, 0.1, 0.2, 0.2)
BBOX_INSIDE_WEIGHTS = (1.0, 1.0, 1.0, 1.0)
FG_THRESH = 0.5
BG_THRESH_HI = 0.5
BG_THRESH_LO = 0.0
TRAIN_BATCH_SIZE = 16          # rois sampled per image (R)
FG_FRACTION = 0.25
NUM_CLASSES = 5

# Fold normalization constants to trace-time Python scalars (cfg defaults pair
# up: x/y share a std, w/h share a std, means are zero, inside weights equal).
assert BBOX_NORMALIZE_STDS[0] == BBOX_NORMALIZE_STDS[1]
assert BBOX_NORMALIZE_STDS[2] == BBOX_NORMALIZE_STDS[3]
assert BBOX_NORMALIZE_MEANS[0] == BBOX_NORMALIZE_MEANS[1]
assert BBOX_NORMALIZE_MEANS[2] == BBOX_NORMALIZE_MEANS[3]
assert len(set(BBOX_INSIDE_WEIGHTS)) == 1
_MEAN_XY = float(BBOX_NORMALIZE_MEANS[0])
_MEAN_WH = float(BBOX_NORMALIZE_MEANS[2])
_INV_STD_XY = 1.0 / float(BBOX_NORMALIZE_STDS[0])
_INV_STD_WH = 1.0 / float(BBOX_NORMALIZE_STDS[2])
_W_IN = float(BBOX_INSIDE_WEIGHTS[0])

LANE = 128


def _round_up(x, m):
    return ((x + m - 1) // m) * m


# ---- Kernel A: pairwise IoU (K, NP) + max / first-argmax / class gather ------
def _overlaps_kernel(rois_ref, gt_ref, out_ref):
    # rois_ref: (Bblk, 4, NP)  rows = [x1, y1, x2, y2], rois lane-dense
    # gt_ref:   (Bblk, K, 5)   cols = [x1, y1, x2, y2, class]
    # out_ref:  (Bblk, 3, NP)  rows = [max_overlap, gt_class, gt_assignment(f32)]
    rt = rois_ref[...]
    gt = gt_ref[...]
    Bblk, K, _ = gt.shape
    NP = rt.shape[2]

    bx1 = rt[:, 0:1, :]; by1 = rt[:, 1:2, :]
    bx2 = rt[:, 2:3, :]; by2 = rt[:, 3:4, :]            # (Bblk, 1, NP)
    gx1 = gt[:, :, 0:1]; gy1 = gt[:, :, 1:2]
    gx2 = gt[:, :, 2:3]; gy2 = gt[:, :, 3:4]            # (Bblk, K, 1)
    gcls = gt[:, :, 4:5]                                # (Bblk, K, 1)

    bw = bx2 - bx1 + 1.0
    bh = by2 - by1 + 1.0
    b_area = bw * bh                                    # (Bblk, 1, NP)
    b_zero = jnp.logical_and(bw == 1.0, bh == 1.0)      # all-zero (padded) rois

    gw = gx2 - gx1 + 1.0
    gh = gy2 - gy1 + 1.0
    g_area = gw * gh                                    # (Bblk, K, 1)
    g_zero = jnp.logical_and(gw == 1.0, gh == 1.0)      # zero-padded gt rows

    iw = jnp.maximum(jnp.minimum(bx2, gx2) - jnp.maximum(bx1, gx1) + 1.0, 0.0)
    ih = jnp.maximum(jnp.minimum(by2, gy2) - jnp.maximum(by1, gy1) + 1.0, 0.0)
    inter = iw * ih                                     # (Bblk, K, NP)
    ua = jnp.maximum(b_area + g_area - inter, 1e-6)     # guard (valid boxes: >=1)
    ov = inter / ua
    ov = jnp.where(g_zero, 0.0, ov)                     # zero-padded gt -> overlap 0
    ov = jnp.where(b_zero, -1.0, ov)                    # zero/padded roi  -> overlap -1

    maxov = jnp.max(ov, axis=1, keepdims=True)          # (Bblk, 1, NP)
    kidx = lax.broadcasted_iota(jnp.int32, (Bblk, K, NP), 1)
    asg = jnp.min(jnp.where(ov >= maxov, kidx, K),
                  axis=1, keepdims=True)                # first argmax, (Bblk, 1, NP)
    onehot = (kidx == asg).astype(jnp.float32)
    lbl = jnp.sum(onehot * gcls, axis=1, keepdims=True)  # gathered class

    out_ref[:, 0:1, :] = maxov
    out_ref[:, 1:2, :] = lbl
    out_ref[:, 2:3, :] = asg.astype(jnp.float32)        # small ints, exact in f32


def compute_overlaps(rois_t, gt_boxes):
    # rois_t: (B, 4, NP) f32, NP multiple of 128; gt_boxes: (B, K, 5) f32
    B, _, NP = rois_t.shape
    K = gt_boxes.shape[1]
    # 2 "parallel" grid steps shard the batch across both TensorCores on v7x;
    # on 1-TC chips (v5e/v6e) the single extra step costs only ~0.35 us.
    G = 2 if (B >= 2 and B % 2 == 0) else 1
    Bblk = B // G
    return pl.pallas_call(
        _overlaps_kernel,
        out_shape=jax.ShapeDtypeStruct((B, 3, NP), jnp.float32),
        grid=(G,),
        in_specs=[pl.BlockSpec((Bblk, 4, NP), lambda g: (g, 0, 0)),
                  pl.BlockSpec((Bblk, K, 5), lambda g: (g, 0, 0))],
        out_specs=pl.BlockSpec((Bblk, 3, NP), lambda g: (g, 0, 0)),
        compiler_params=pltpu.CompilerParams(dimension_semantics=("parallel",)),
    )(rois_t, gt_boxes)


# ---- Kernel B: bbox_transform + normalization + fg weighting (one step) ------
def _targets_kernel(ex_ref, gt_ref, lbl_ref, out_ref):
    # ex_ref/gt_ref: (4, L)  rows = [x1, y1, x2, y2], rois lane-dense over B*R
    # lbl_ref:       (1, L)
    # out_ref:       (12, L) rows 0:4 targets, 4:8 inside weights, 8:12 outside
    ex = ex_ref[...]
    gt = gt_ref[...]
    fg = lbl_ref[...] > 0.0                              # (1, L)
    L = ex.shape[1]

    # paired slices: one (2, L) op instead of four 1-row extracts
    ex_wh = jnp.maximum(ex[2:4, :] - ex[0:2, :] + 1.0, 1e-6)   # guard malformed rois
    gt_wh = jnp.maximum(gt[2:4, :] - gt[0:2, :] + 1.0, 1e-6)
    ex_c = ex[0:2, :] + 0.5 * ex_wh
    gt_c = gt[0:2, :] + 0.5 * gt_wh

    d_xy = (gt_c - ex_c) / ex_wh                         # (2, L)
    d_wh = jnp.log(gt_wh / ex_wh)                        # (2, L)
    if _MEAN_XY != 0.0:                                  # folded at trace time
        d_xy = d_xy - _MEAN_XY
    if _MEAN_WH != 0.0:
        d_wh = d_wh - _MEAN_WH
    d_xy = d_xy * _INV_STD_XY
    d_wh = d_wh * _INV_STD_WH

    out_ref[0:2, :] = jnp.where(fg, d_xy, 0.0)           # direct per-range stores
    out_ref[2:4, :] = jnp.where(fg, d_wh, 0.0)
    fg4 = jnp.broadcast_to(jnp.where(fg, 1.0, 0.0), (4, L))
    out_ref[4:8, :] = fg4 * _W_IN
    out_ref[8:12, :] = fg4 * (1.0 if _W_IN > 0.0 else 0.0)


def compute_targets(ex_t, gt_t, lbl_t):
    L = ex_t.shape[1]
    return pl.pallas_call(
        _targets_kernel,
        out_shape=jax.ShapeDtypeStruct((12, L), jnp.float32),
        grid=(1,),
        in_specs=[pl.BlockSpec((4, L), lambda i: (0, 0)),
                  pl.BlockSpec((4, L), lambda i: (0, 0)),
                  pl.BlockSpec((1, L), lambda i: (0, 0))],
        out_specs=pl.BlockSpec((12, L), lambda i: (0, 0)),
    )(ex_t, gt_t, lbl_t)


# ---- On-device fg/bg sampling (per image, vmapped over batch) ----------------
def _sample_rois(maxov, lbl, asg, rois_cat, gt_boxes):
    # maxov/lbl: (N,) f32, asg: (N,) i32, rois_cat: (N,5), gt_boxes: (K,5)
    N = maxov.shape[0]
    R = TRAIN_BATCH_SIZE
    fg_per_img = max(1, int(round(FG_FRACTION * R)))

    idx = jnp.arange(N, dtype=jnp.int32)
    fg_mask = maxov >= FG_THRESH
    bg_mask = jnp.logical_and(maxov < BG_THRESH_HI, maxov >= BG_THRESH_LO)
    fg_num = jnp.sum(fg_mask.astype(jnp.int32))
    bg_num = jnp.sum(bg_mask.astype(jnp.int32))

    # O(N) mask compaction (cumsum + OOB-dropping scatter) instead of argsort:
    # fg_list[0:fg_num] = indices of fg rois in ascending order (same for bg).
    fg_pos = jnp.cumsum(fg_mask.astype(jnp.int32)) - 1
    bg_pos = jnp.cumsum(bg_mask.astype(jnp.int32)) - 1
    fg_list = jnp.zeros((N,), jnp.int32).at[
        jnp.where(fg_mask, fg_pos, N)].set(idx, mode="drop")
    bg_list = jnp.zeros((N,), jnp.int32).at[
        jnp.where(bg_mask, bg_pos, N)].set(idx, mode="drop")

    has_fg = fg_num > 0
    has_bg = bg_num > 0
    # TODO(synk): reference uses npr/torch random permutation/choice for fg/bg
    # sampling; selection here is deterministic (first-k fg, cyclic bg fill).
    # Also the "fg_num == 0 and bg_num == 0" case raises in the reference; here
    # it falls back to roi 0 instead of raising.
    fg_this = jnp.where(jnp.logical_and(has_fg, has_bg),
                        jnp.minimum(fg_per_img, fg_num),
                        jnp.where(has_fg, R, 0)).astype(jnp.int32)

    j = jnp.arange(R, dtype=jnp.int32)
    fg_take = fg_list[j % jnp.maximum(fg_num, 1)]
    bg_take = bg_list[(j - fg_this) % jnp.maximum(bg_num, 1)]
    is_fg_slot = j < fg_this
    keep = jnp.where(is_fg_slot, fg_take, bg_take)       # (R,)

    labels = jnp.where(is_fg_slot, lbl[keep], 0.0)       # bg labels -> 0
    rois = rois_cat[keep]                                # (R, 5)
    gt_rois = gt_boxes[asg[keep]]                        # (R, 5)
    return labels, rois, gt_rois


# ---- Forward ----------------------------------------------------------------
@jax.jit
def proposal_target_forward(all_rois, gt_boxes):
    B, N0, _ = all_rois.shape
    K = gt_boxes.shape[1]
    R = TRAIN_BATCH_SIZE
    N = N0 + K
    NP = _round_up(N, LANE)

    # append gt boxes to rois (batch-index column = 0, as in the reference)
    gt_append = jnp.concatenate(
        [jnp.zeros((B, K, 1), jnp.float32), gt_boxes[:, :, :4]], axis=2)
    all_rois_cat = jnp.concatenate([all_rois, gt_append], axis=1)     # (B, N, 5)

    # Kernel-A input: coords only (batch-idx column dropped), rois on lanes,
    # padded to a lane multiple.  The transpose rides on the pad copy that is
    # needed anyway, so this is a single fused build, not an extra round trip.
    rois_t = jnp.swapaxes(all_rois_cat[:, :, 1:5], 1, 2)              # (B, 4, N)
    rois_t = jnp.pad(rois_t, ((0, 0), (0, 0), (0, NP - N)))           # (B, 4, NP)

    packed = compute_overlaps(rois_t, gt_boxes)                       # (B, 3, NP)
    maxov = packed[:, 0, :N]
    lbl = packed[:, 1, :N]
    asg = packed[:, 2, :N].astype(jnp.int32)

    labels, rois, gt_rois = jax.vmap(_sample_rois)(
        maxov, lbl, asg, all_rois_cat, gt_boxes)      # (B,R), (B,R,5), (B,R,5)

    # overwrite batch-index column with the image index
    batch_col = jnp.broadcast_to(
        jnp.arange(B, dtype=jnp.float32).reshape(B, 1, 1), (B, R, 1))
    rois = jnp.concatenate([batch_col, rois[:, :, 1:5]], axis=2)

    # Kernel-B inputs: flattened lane-dense (4, L) with L = pad(B*R, 128)
    BR = B * R
    L = _round_up(BR, LANE)
    ex_t = jnp.pad(jnp.swapaxes(rois[:, :, 1:5].reshape(BR, 4), 0, 1),
                   ((0, 0), (0, L - BR)))
    gt_t = jnp.pad(jnp.swapaxes(gt_rois[:, :, :4].reshape(BR, 4), 0, 1),
                   ((0, 0), (0, L - BR)))
    lbl_t = jnp.pad(labels.reshape(1, BR), ((0, 0), (0, L - BR)))

    slab = compute_targets(ex_t, gt_t, lbl_t)                         # (12, L)
    bbox_targets = jnp.swapaxes(slab[0:4, :BR], 0, 1).reshape(B, R, 4)
    inside_w = jnp.swapaxes(slab[4:8, :BR], 0, 1).reshape(B, R, 4)
    outside_w = jnp.swapaxes(slab[8:12, :BR], 0, 1).reshape(B, R, 4)
    return rois, labels, bbox_targets, inside_w, outside_w


if __name__ == "__main__":
    B, N0, K = 2, 24, 8
    key = jax.random.PRNGKey(0)
    k1, k2, k3, k4, k5 = jax.random.split(key, 5)

    # ground-truth boxes: 5 valid per image, 3 zero-padded
    gt_xy = jax.random.uniform(k1, (B, K, 2), minval=0.0, maxval=40.0)
    gt_wh = jax.random.uniform(k2, (B, K, 2), minval=8.0, maxval=24.0)
    gt_cls = jax.random.randint(k3, (B, K, 1), 1, NUM_CLASSES).astype(jnp.float32)
    gt_boxes = jnp.concatenate([gt_xy, gt_xy + gt_wh, gt_cls], axis=2)
    valid = (jnp.arange(K) < 5).astype(jnp.float32).reshape(1, K, 1)
    gt_boxes = (gt_boxes * valid).astype(jnp.float32)

    # proposals: jittered copies of valid gt boxes + random boxes
    n_jit = 10
    jit = jax.random.uniform(k4, (B, n_jit, 4), minval=-2.0, maxval=2.0)
    base = jnp.tile(gt_boxes[:, :5, :4], (1, 2, 1))                   # (B, 10, 4)
    prop_jit = base + jit
    rnd_xy = jax.random.uniform(k5, (B, N0 - n_jit, 2), minval=0.0, maxval=50.0)
    rnd_wh = jax.random.uniform(jax.random.fold_in(k5, 1),
                                (B, N0 - n_jit, 2), minval=6.0, maxval=20.0)
    prop_rnd = jnp.concatenate([rnd_xy, rnd_xy + rnd_wh], axis=2)
    prop = jnp.concatenate([prop_jit, prop_rnd], axis=1)              # (B, N0, 4)
    batch_idx = jnp.broadcast_to(
        jnp.arange(B, dtype=jnp.float32).reshape(B, 1, 1), (B, N0, 1))
    all_rois = jnp.concatenate([batch_idx, prop], axis=2).astype(jnp.float32)

    rois, labels, bbox_targets, inside_w, outside_w = proposal_target_forward(
        all_rois, gt_boxes)
    jax.block_until_ready((rois, labels, bbox_targets, inside_w, outside_w))

    assert rois.shape == (B, TRAIN_BATCH_SIZE, 5)
    assert labels.shape == (B, TRAIN_BATCH_SIZE)
    assert bbox_targets.shape == (B, TRAIN_BATCH_SIZE, 4)
    assert inside_w.shape == (B, TRAIN_BATCH_SIZE, 4)
    assert outside_w.shape == (B, TRAIN_BATCH_SIZE, 4)
    assert bool(jnp.all(jnp.isfinite(bbox_targets)))
    assert bool(jnp.all(jnp.isfinite(labels)))
    print("KERNEL_OK")
</pallas_src>

<mosaic_0001>
module attributes {stable_mosaic.version = 11 : i64} {
  func.func @_overlaps_kernel(%arg0: i32, %arg1: memref<1x4x128xf32, #tpu.memory_space<vmem>>, %arg2: memref<1x8x5xf32, #tpu.memory_space<vmem>>, %arg3: memref<1x3x128xf32, #tpu.memory_space<vmem>>) attributes {dimension_semantics = [#tpu.dimension_semantics<parallel>], iteration_bounds = array<i64: 2>, scalar_prefetch = 0 : i64, scratch_operands = 0 : i64, tpu.core_type = #tpu.core_type<tc>, window_params = [{transform_indices = @transform_0, window_bounds = array<i64: 1, 4, 128>}, {transform_indices = @transform_1, window_bounds = array<i64: 1, 8, 5>}, {transform_indices = @transform_2, window_bounds = array<i64: 1, 3, 128>}]} {
    %c0 = arith.constant 0 : index
    %c0_0 = arith.constant 0 : index
    %c0_1 = arith.constant 0 : index
    %0 = vector.load %arg1[%c0, %c0_0, %c0_1] : memref<1x4x128xf32, #tpu.memory_space<vmem>>, vector<1x4x128xf32>
    %c0_2 = arith.constant 0 : index
    %c0_3 = arith.constant 0 : index
    %c0_4 = arith.constant 0 : index
    %1 = vector.load %arg2[%c0_2, %c0_3, %c0_4] : memref<1x8x5xf32, #tpu.memory_space<vmem>>, vector<1x8x5xf32>
    %2 = vector.extract_strided_slice %0 {offsets = [0, 0, 0], sizes = [1, 1, 128], strides = [1, 1, 1]} : vector<1x4x128xf32> to vector<1x1x128xf32>
    %3 = vector.extract_strided_slice %0 {offsets = [0, 1, 0], sizes = [1, 1, 128], strides = [1, 1, 1]} : vector<1x4x128xf32> to vector<1x1x128xf32>
    %4 = vector.extract_strided_slice %0 {offsets = [0, 2, 0], sizes = [1, 1, 128], strides = [1, 1, 1]} : vector<1x4x128xf32> to vector<1x1x128xf32>
    %5 = vector.extract_strided_slice %0 {offsets = [0, 3, 0], sizes = [1, 1, 128], strides = [1, 1, 1]} : vector<1x4x128xf32> to vector<1x1x128xf32>
    %6 = vector.extract_strided_slice %1 {offsets = [0, 0, 0], sizes = [1, 8, 1], strides = [1, 1, 1]} : vector<1x8x5xf32> to vector<1x8x1xf32>
    %7 = vector.extract_strided_slice %1 {offsets = [0, 0, 1], sizes = [1, 8, 1], strides = [1, 1, 1]} : vector<1x8x5xf32> to vector<1x8x1xf32>
    %8 = vector.extract_strided_slice %1 {offsets = [0, 0, 2], sizes = [1, 8, 1], strides = [1, 1, 1]} : vector<1x8x5xf32> to vector<1x8x1xf32>
    %9 = vector.extract_strided_slice %1 {offsets = [0, 0, 3], sizes = [1, 8, 1], strides = [1, 1, 1]} : vector<1x8x5xf32> to vector<1x8x1xf32>
    %10 = vector.extract_strided_slice %1 {offsets = [0, 0, 4], sizes = [1, 8, 1], strides = [1, 1, 1]} : vector<1x8x5xf32> to vector<1x8x1xf32>
    %11 = arith.subf %4, %2 : vector<1x1x128xf32>
    %cst = arith.constant 1.000000e+00 : f32
    %12 = vector.broadcast %cst : f32 to vector<1x1x128xf32>
    %13 = arith.addf %11, %12 : vector<1x1x128xf32>
    %14 = arith.subf %5, %3 : vector<1x1x128xf32>
    %cst_5 = arith.constant 1.000000e+00 : f32
    %15 = vector.broadcast %cst_5 : f32 to vector<1x1x128xf32>
    %16 = arith.addf %14, %15 : vector<1x1x128xf32>
    %17 = arith.mulf %13, %16 : vector<1x1x128xf32>
    %cst_6 = arith.constant 1.000000e+00 : f32
    %18 = vector.broadcast %cst_6 : f32 to vector<1x1x128xf32>
    %19 = arith.cmpf oeq, %13, %18 : vector<1x1x128xf32>
    %cst_7 = arith.constant 1.000000e+00 : f32
    %20 = vector.broadcast %cst_7 : f32 to vector<1x1x128xf32>
    %21 = arith.cmpf oeq, %16, %20 : vector<1x1x128xf32>
    %22 = arith.andi %19, %21 : vector<1x1x128xi1>
    %23 = arith.subf %8, %6 : vector<1x8x1xf32>
    %cst_8 = arith.constant 1.000000e+00 : f32
    %24 = vector.broadcast %cst_8 : f32 to vector<1x8x1xf32>
    %25 = arith.addf %23, %24 : vector<1x8x1xf32>
    %26 = arith.subf %9, %7 : vector<1x8x1xf32>
    %cst_9 = arith.constant 1.000000e+00 : f32
    %27 = vector.broadcast %cst_9 : f32 to vector<1x8x1xf32>
    %28 = arith.addf %26, %27 : vector<1x8x1xf32>
    %29 = arith.mulf %25, %28 : vector<1x8x1xf32>
    %cst_10 = arith.constant 1.000000e+00 : f32
    %30 = vector.broadcast %cst_10 : f32 to vector<1x8x1xf32>
    %31 = arith.cmpf oeq, %25, %30 : vector<1x8x1xf32>
    %cst_11 = arith.constant 1.000000e+00 : f32
    %32 = vector.broadcast %cst_11 : f32 to vector<1x8x1xf32>
    %33 = arith.cmpf oeq, %28, %32 : vector<1x8x1xf32>
    %34 = arith.andi %31, %33 : vector<1x8x1xi1>
    %35 = vector.broadcast %4 : vector<1x1x128xf32> to vector<1x8x128xf32>
    %36 = vector.broadcast %8 : vector<1x8x1xf32> to vector<1x8x128xf32>
    %37 = arith.minimumf %35, %36 : vector<1x8x128xf32>
    %38 = vector.broadcast %2 : vector<1x1x128xf32> to vector<1x8x128xf32>
    %39 = vector.broadcast %6 : vector<1x8x1xf32> to vector<1x8x128xf32>
    %40 = arith.maximumf %38, %39 : vector<1x8x128xf32>
    %41 = arith.subf %37, %40 : vector<1x8x128xf32>
    %cst_12 = arith.constant 1.000000e+00 : f32
    %42 = vector.broadcast %cst_12 : f32 to vector<1x8x128xf32>
    %43 = arith.addf %41, %42 : vector<1x8x128xf32>
    %cst_13 = arith.constant 0.000000e+00 : f32
    %44 = vector.broadcast %cst_13 : f32 to vector<1x8x128xf32>
    %45 = arith.maximumf %43, %44 : vector<1x8x128xf32>
    %46 = vector.broadcast %5 : vector<1x1x128xf32> to vector<1x8x128xf32>
    %47 = vector.broadcast %9 : vector<1x8x1xf32> to vector<1x8x128xf32>
    %48 = arith.minimumf %46, %47 : vector<1x8x128xf32>
    %49 = vector.broadcast %3 : vector<1x1x128xf32> to vector<1x8x128xf32>
    %50 = vector.broadcast %7 : vector<1x8x1xf32> to vector<1x8x128xf32>
    %51 = arith.maximumf %49, %50 : vector<1x8x128xf32>
    %52 = arith.subf %48, %51 : vector<1x8x128xf32>
    %cst_14 = arith.constant 1.000000e+00 : f32
    %53 = vector.broadcast %cst_14 : f32 to vector<1x8x128xf32>
    %54 = arith.addf %52, %53 : vector<1x8x128xf32>
    %cst_15 = arith.constant 0.000000e+00 : f32
    %55 = vector.broadcast %cst_15 : f32 to vector<1x8x128xf32>
    %56 = arith.maximumf %54, %55 : vector<1x8x128xf32>
    %57 = arith.mulf %45, %56 : vector<1x8x128xf32>
    %58 = vector.broadcast %17 : vector<1x1x128xf32> to vector<1x8x128xf32>
    %59 = vector.broadcast %29 : vector<1x8x1xf32> to vector<1x8x128xf32>
    %60 = arith.addf %58, %59 : vector<1x8x128xf32>
    %61 = arith.subf %60, %57 : vector<1x8x128xf32>
    %cst_16 = arith.constant 9.99999997E-7 : f32
    %62 = vector.broadcast %cst_16 : f32 to vector<1x8x128xf32>
    %63 = arith.maximumf %61, %62 : vector<1x8x128xf32>
    %64 = arith.divf %57, %63 : vector<1x8x128xf32>
    %cst_17 = arith.constant 0.000000e+00 : f32
    %65 = vector.shape_cast %34 : vector<1x8x1xi1> to vector<1x8x1xi1>
    %66 = vector.broadcast %65 : vector<1x8x1xi1> to vector<1x8x128xi1>
    %67 = vector.broadcast %cst_17 : f32 to vector<1x8x128xf32>
    %68 = arith.select %66, %67, %64 : vector<1x8x128xi1>, vector<1x8x128xf32>
    %cst_18 = arith.constant -1.000000e+00 : f32
    %69 = vector.shape_cast %22 : vector<1x1x128xi1> to vector<1x1x128xi1>
    %70 = vector.broadcast %69 : vector<1x1x128xi1> to vector<1x8x128xi1>
    %71 = vector.broadcast %cst_18 : f32 to vector<1x8x128xf32>
    %72 = arith.select %70, %71, %68 : vector<1x8x128xi1>, vector<1x8x128xf32>
    %cst_19 = arith.constant dense<0xFF800000> : vector<1x128xf32>
    %73 = vector.multi_reduction <maximumf>, %72, %cst_19 [1] : vector<1x8x128xf32> to vector<1x128xf32>
    %74 = vector.shape_cast %73 : vector<1x128xf32> to vector<1x1x128xf32>
    %75 = tpu.iota {dimensions = array<i32: 1>} : vector<1x8x128xi32>
    %76 = vector.broadcast %74 : vector<1x1x128xf32> to vector<1x8x128xf32>
    %77 = arith.cmpf oge, %72, %76 : vector<1x8x128xf32>
    %c8_i32 = arith.constant 8 : i32
    %78 = vector.broadcast %c8_i32 : i32 to vector<1x8x128xi32>
    %79 = arith.select %77, %75, %78 : vector<1x8x128xi1>, vector<1x8x128xi32>
    %cst_20 = arith.constant dense<2147483647> : vector<1x128xi32>
    %80 = vector.multi_reduction <minsi>, %79, %cst_20 [1] : vector<1x8x128xi32> to vector<1x128xi32>
    %81 = vector.shape_cast %80 : vector<1x128xi32> to vector<1x1x128xi32>
    %82 = vector.broadcast %81 : vector<1x1x128xi32> to vector<1x8x128xi32>
    %83 = arith.cmpi eq, %75, %82 : vector<1x8x128xi32>
    %84 = arith.extui %83 : vector<1x8x128xi1> to vector<1x8x128xi32>
    %85 = arith.sitofp %84 : vector<1x8x128xi32> to vector<1x8x128xf32>
    %86 = vector.broadcast %10 : vector<1x8x1xf32> to vector<1x8x128xf32>
    %87 = arith.mulf %85, %86 : vector<1x8x128xf32>
    %cst_21 = arith.constant dense<0.000000e+00> : vector<1x128xf32>
    %88 = vector.multi_reduction <add>, %87, %cst_21 [1] : vector<1x8x128xf32> to vector<1x128xf32>
    %89 = vector.shape_cast %88 : vector<1x128xf32> to vector<1x1x128xf32>
    %c0_22 = arith.constant 0 : index
    %c0_23 = arith.constant 0 : index
    %c0_24 = arith.constant 0 : index
    %90 = vector.load %arg3[%c0_22, %c0_23, %c0_24] : memref<1x3x128xf32, #tpu.memory_space<vmem>>, vector<1x1x128xf32>
    tpu.vector_store %arg3[%c0_22, %c0_23, %c0_24], %74 {strides = array<i32>} : memref<1x3x128xf32, #tpu.memory_space<vmem>>, vector<1x1x128xf32>,
    %c0_25 = arith.constant 0 : index
    %c1 = arith.constant 1 : index
    %c0_26 = arith.constant 0 : index
    %91 = vector.load %arg3[%c0_25, %c1, %c0_26] : memref<1x3x128xf32, #tpu.memory_space<vmem>>, vector<1x1x128xf32>
    tpu.vector_store %arg3[%c0_25, %c1, %c0_26], %89 {strides = array<i32>} : memref<1x3x128xf32, #tpu.memory_space<vmem>>, vector<1x1x128xf32>,
    %92 = arith.sitofp %81 : vector<1x1x128xi32> to vector<1x1x128xf32>
    %c0_27 = arith.constant 0 : index
    %c2 = arith.constant 2 : index
    %c0_28 = arith.constant 0 : index
    %93 = vector.load %arg3[%c0_27, %c2, %c0_28] : memref<1x3x128xf32, #tpu.memory_space<vmem>>, vector<1x1x128xf32>
    tpu.vector_store %arg3[%c0_27, %c2, %c0_28], %92 {strides = array<i32>} : memref<1x3x128xf32, #tpu.memory_space<vmem>>, vector<1x1x128xf32>,
    return
  }
  func.func @transform_0(%arg0: i32) -> (i32, i32, i32) {
    %c0_i32 = arith.constant 0 : i32
    %c0_i32_0 = arith.constant 0 : i32
    %c0_i32_1 = arith.constant 0 : i32
    return %arg0, %c0_i32, %c0_i32_0 : i32, i32, i32
  }
  func.func @transform_1(%arg0: i32) -> (i32, i32, i32) {
    %c0_i32 = arith.constant 0 : i32
    %c0_i32_0 = arith.constant 0 : i32
    %c0_i32_1 = arith.constant 0 : i32
    return %arg0, %c0_i32, %c0_i32_0 : i32, i32, i32
  }
  func.func @transform_2(%arg0: i32) -> (i32, i32, i32) {
    %c0_i32 = arith.constant 0 : i32
    %c0_i32_0 = arith.constant 0 : i32
    %c0_i32_1 = arith.constant 0 : i32
    return %arg0, %c0_i32, %c0_i32_0 : i32, i32, i32
  }
}

module attributes {stable_mosaic.version = 11 : i64} {
  func.func @_targets_kernel(%arg0: i32, %arg1: memref<4x128xf32, #tpu.memory_space<vmem>>, %arg2: memref<4x128xf32, #tpu.memory_space<vmem>>, %arg3: memref<1x128xf32, #tpu.memory_space<vmem>>, %arg4: memref<12x128xf32, #tpu.memory_space<vmem>>) attributes {dimension_semantics = [#tpu.dimension_semantics<arbitrary>], iteration_bounds = array<i64: 1>, scalar_prefetch = 0 : i64, scratch_operands = 0 : i64, tpu.core_type = #tpu.core_type<tc>, window_params = [{pipeline_mode = #tpu.pipeline_mode<synchronous>, transform_indices = @transform_0, window_bounds = array<i64: 4, 128>}, {pipeline_mode = #tpu.pipeline_mode<synchronous>, transform_indices = @transform_1, window_bounds = array<i64: 4, 128>}, {pipeline_mode = #tpu.pipeline_mode<synchronous>, transform_indices = @transform_2, window_bounds = array<i64: 1, 128>}, {pipeline_mode = #tpu.pipeline_mode<synchronous>, transform_indices = @transform_3, window_bounds = array<i64: 12, 128>}]} {
    %c0 = arith.constant 0 : index
    %c0_0 = arith.constant 0 : index
    %0 = vector.load %arg1[%c0, %c0_0] : memref<4x128xf32, #tpu.memory_space<vmem>>, vector<4x128xf32>
    %c0_1 = arith.constant 0 : index
    %c0_2 = arith.constant 0 : index
    %1 = vector.load %arg2[%c0_1, %c0_2] : memref<4x128xf32, #tpu.memory_space<vmem>>, vector<4x128xf32>
    %c0_3 = arith.constant 0 : index
    %c0_4 = arith.constant 0 : index
    %2 = vector.load %arg3[%c0_3, %c0_4] : memref<1x128xf32, #tpu.memory_space<vmem>>, vector<1x128xf32>
    %cst = arith.constant 0.000000e+00 : f32
    %3 = vector.broadcast %cst : f32 to vector<1x128xf32>
    %4 = arith.cmpf ogt, %2, %3 : vector<1x128xf32>
    %5 = vector.extract_strided_slice %0 {offsets = [2, 0], sizes = [2, 128], strides = [1, 1]} : vector<4x128xf32> to vector<2x128xf32>
    %6 = vector.extract_strided_slice %0 {offsets = [0, 0], sizes = [2, 128], strides = [1, 1]} : vector<4x128xf32> to vector<2x128xf32>
    %7 = arith.subf %5, %6 : vector<2x128xf32>
    %cst_5 = arith.constant 1.000000e+00 : f32
    %8 = vector.broadcast %cst_5 : f32 to vector<2x128xf32>
    %9 = arith.addf %7, %8 : vector<2x128xf32>
    %cst_6 = arith.constant 9.99999997E-7 : f32
    %10 = vector.broadcast %cst_6 : f32 to vector<2x128xf32>
    %11 = arith.maximumf %9, %10 : vector<2x128xf32>
    %12 = vector.extract_strided_slice %1 {offsets = [2, 0], sizes = [2, 128], strides = [1, 1]} : vector<4x128xf32> to vector<2x128xf32>
    %13 = vector.extract_strided_slice %1 {offsets = [0, 0], sizes = [2, 128], strides = [1, 1]} : vector<4x128xf32> to vector<2x128xf32>
    %14 = arith.subf %12, %13 : vector<2x128xf32>
    %cst_7 = arith.constant 1.000000e+00 : f32
    %15 = vector.broadcast %cst_7 : f32 to vector<2x128xf32>
    %16 = arith.addf %14, %15 : vector<2x128xf32>
    %cst_8 = arith.constant 9.99999997E-7 : f32
    %17 = vector.broadcast %cst_8 : f32 to vector<2x128xf32>
    %18 = arith.maximumf %16, %17 : vector<2x128xf32>
    %19 = vector.extract_strided_slice %0 {offsets = [0, 0], sizes = [2, 128], strides = [1, 1]} : vector<4x128xf32> to vector<2x128xf32>
    %cst_9 = arith.constant 5.000000e-01 : f32
    %20 = vector.broadcast %cst_9 : f32 to vector<2x128xf32>
    %21 = arith.mulf %20, %11 : vector<2x128xf32>
    %22 = arith.addf %19, %21 : vector<2x128xf32>
    %23 = vector.extract_strided_slice %1 {offsets = [0, 0], sizes = [2, 128], strides = [1, 1]} : vector<4x128xf32> to vector<2x128xf32>
    %cst_10 = arith.constant 5.000000e-01 : f32
    %24 = vector.broadcast %cst_10 : f32 to vector<2x128xf32>
    %25 = arith.mulf %24, %18 : vector<2x128xf32>
    %26 = arith.addf %23, %25 : vector<2x128xf32>
    %27 = arith.subf %26, %22 : vector<2x128xf32>
    %28 = arith.divf %27, %11 : vector<2x128xf32>
    %29 = arith.divf %18, %11 : vector<2x128xf32>
    %30 = math.log %29 : vector<2x128xf32>
    %cst_11 = arith.constant 1.000000e+01 : f32
    %31 = vector.broadcast %cst_11 : f32 to vector<2x128xf32>
    %32 = arith.mulf %28, %31 : vector<2x128xf32>
    %cst_12 = arith.constant 5.000000e+00 : f32
    %33 = vector.broadcast %cst_12 : f32 to vector<2x128xf32>
    %34 = arith.mulf %30, %33 : vector<2x128xf32>
    %cst_13 = arith.constant 0.000000e+00 : f32
    %35 = vector.shape_cast %4 : vector<1x128xi1> to vector<1x128xi1>
    %36 = vector.broadcast %35 : vector<1x128xi1> to vector<2x128xi1>
    %37 = vector.broadcast %cst_13 : f32 to vector<2x128xf32>
    %38 = arith.select %36, %32, %37 : vector<2x128xi1>, vector<2x128xf32>
    %c0_14 = arith.constant 0 : index
    %c0_15 = arith.constant 0 : index
    %39 = vector.load %arg4[%c0_14, %c0_15] : memref<12x128xf32, #tpu.memory_space<vmem>>, vector<2x128xf32>
    tpu.vector_store %arg4[%c0_14, %c0_15], %38 {strides = array<i32>} : memref<12x128xf32, #tpu.memory_space<vmem>>, vector<2x128xf32>,
    %cst_16 = arith.constant 0.000000e+00 : f32
    %40 = vector.shape_cast %4 : vector<1x128xi1> to vector<1x128xi1>
    %41 = vector.broadcast %40 : vector<1x128xi1> to vector<2x128xi1>
    %42 = vector.broadcast %cst_16 : f32 to vector<2x128xf32>
    %43 = arith.select %41, %34, %42 : vector<2x128xi1>, vector<2x128xf32>
    %c2 = arith.constant 2 : index
    %c0_17 = arith.constant 0 : index
    %44 = vector.load %arg4[%c2, %c0_17] : memref<12x128xf32, #tpu.memory_space<vmem>>, vector<2x128xf32>
    tpu.vector_store %arg4[%c2, %c0_17], %43 {strides = array<i32>} : memref<12x128xf32, #tpu.memory_space<vmem>>, vector<2x128xf32>,
    %cst_18 = arith.constant 1.000000e+00 : f32
    %cst_19 = arith.constant 0.000000e+00 : f32
    %45 = vector.broadcast %cst_18 : f32 to vector<1x128xf32>
    %46 = vector.broadcast %cst_19 : f32 to vector<1x128xf32>
    %47 = arith.select %4, %45, %46 : vector<1x128xi1>, vector<1x128xf32>
    %48 = vector.shape_cast %47 : vector<1x128xf32> to vector<1x128xf32>
    %49 = vector.broadcast %48 : vector<1x128xf32> to vector<4x128xf32>
    %cst_20 = arith.constant 1.000000e+00 : f32
    %50 = vector.broadcast %cst_20 : f32 to vector<4x128xf32>
    %51 = arith.mulf %49, %50 : vector<4x128xf32>
    %c4 = arith.constant 4 : index
    %c0_21 = arith.constant 0 : index
    %52 = vector.load %arg4[%c4, %c0_21] : memref<12x128xf32, #tpu.memory_space<vmem>>, vector<4x128xf32>
    tpu.vector_store %arg4[%c4, %c0_21], %51 {strides = array<i32>} : memref<12x128xf32, #tpu.memory_space<vmem>>, vector<4x128xf32>,
    %cst_22 = arith.constant 1.000000e+00 : f32
    %53 = vector.broadcast %cst_22 : f32 to vector<4x128xf32>
    %54 = arith.mulf %49, %53 : vector<4x128xf32>
    %c8 = arith.constant 8 : index
    %c0_23 = arith.constant 0 : index
    %55 = vector.load %arg4[%c8, %c0_23] : memref<12x128xf32, #tpu.memory_space<vmem>>, vector<4x128xf32>
    tpu.vector_store %arg4[%c8, %c0_23], %54 {strides = array<i32>} : memref<12x128xf32, #tpu.memory_space<vmem>>, vector<4x128xf32>,
    return
  }
  func.func @transform_0(%arg0: i32) -> (i32, i32) {
    %c0_i32 = arith.constant 0 : i32
    %c0_i32_0 = arith.constant 0 : i32
    %c0_i32_1 = arith.constant 0 : i32
    return %c0_i32, %c0_i32_0 : i32, i32
  }
  func.func @transform_1(%arg0: i32) -> (i32, i32) {
    %c0_i32 = arith.constant 0 : i32
    %c0_i32_0 = arith.constant 0 : i32
    %c0_i32_1 = arith.constant 0 : i32
    return %c0_i32, %c0_i32_0 : i32, i32
  }
  func.func @transform_2(%arg0: i32) -> (i32, i32) {
    %c0_i32 = arith.constant 0 : i32
    %c0_i32_0 = arith.constant 0 : i32
    %c0_i32_1 = arith.constant 0 : i32
    return %c0_i32, %c0_i32_0 : i32, i32
  }
  func.func @transform_3(%arg0: i32) -> (i32, i32) {
    %c0_i32 = arith.constant 0 : i32
    %c0_i32_0 = arith.constant 0 : i32
    %c0_i32_1 = arith.constant 0 : i32
    return %c0_i32, %c0_i32_0 : i32, i32
  }
}

</mosaic_0001>

<llo_original>
// kernel: proposal_target_forward.2
$region0: #{proposal_target_forward.2}
  #allocation0 [shape = 'u32[]', space=smem, size = 0x4, offset = 0x4, fixed_abs, tag = 'smem constant byte address 0x4 - core index']
  #allocation1 [shape = 'u32[72,128]{1,0:T(1,128)}', space=vmem, size = 0x9000, scoped, tag = 'internal scratch']
  %s0 = inlined_call_operand.vmem [shape: f32[2,4,128], index: 0, kind: input, shape index: {}]
  %s1 = inlined_call_operand.vmem [shape: f32[2,8,5], index: 1, kind: input, shape index: {}]
  %s2 = inlined_call_operand.vmem [shape: f32[2,3,128], index: 2, kind: output, shape index: {}]
  %s3 = sld [smem:[#allocation0]]
  $region41: #{proposal_target_forward.2} parent=0
    _
  %s5 = ssub.s32 1, %s3
  %s6 = scalar_select 0, %s5, %s3
  loop: start=0, step=1, limit=4
  $region2: #{proposal_target_forward.2} parent=0 // loop_pre_header
    _
  $region3: #{proposal_target_forward.2} parent=0 // loop_header
    %s8 = sphi 0, %s12
    %p9 = scmp.ge.s32.totalorder %s8, 4
    %s18 = sphi 0, %s20
    %s21 = sphi 0, %s18
    %s22 = sphi 0, %s21
    %s38 = sphi 0, %s22
    %s44 = sphi 0, %s46
    %s47 = sphi 0, %s44
    %s48 = sphi 0, %s47
    %s64 = sphi 0, %s48
    %s70 = sphi 0, %s72
    %s73 = sphi 0, %s70
    %s74 = sphi 0, %s73
    %s90 = sphi 0, %s74
  $region4: #{proposal_target_forward.2} parent=0 // loop_header_branch
    %11 = sbr.rel (%p9) target = $region8
  $region5: #{proposal_target_forward.2} parent=0 // loop_body
    %s13 = ssub.s32 %s8, 1
    %s14 = ssub.s32 %s8, 2
    %s15 = sadd.s32 %s8, 1
    %s16 = ssub.s32 %s8, %s15
    %p17 = scmp.eq.s32.totalorder %s16, 0
    %s19 = sadd.s32 %s18, 1
    %s20 = scalar_select %p17, %s18, %s19
    %p23 = pneg %p17
    %p24 = scmp.eq.s32.totalorder %s8, 1
    %p25 = por %p23, %p24
    %p26 = scmp.ne.s32.totalorder %s18, %s21
    %p27 = scmp.eq.s32.totalorder %s8, 0
    %p28 = por %p26, %p27
    %p29 = scmp.ne.s32.totalorder %s18, %s21
    %p30 = scmp.eq.s32.totalorder %s13, 1
    %p31 = por %p29, %p30
    %p32 = scmp.ne.s32.totalorder %s21, %s22
    %p33 = scmp.eq.s32.totalorder %s13, 0
    %p34 = por %p32, %p33
    %p35 = scmp.ne.s32.totalorder %s21, %s22
    %p36 = scmp.eq.s32.totalorder %s14, 1
    %p37 = por %p35, %p36
    %p39 = scmp.ne.s32.totalorder %s22, %s38
    %p40 = scmp.eq.s32.totalorder %s14, 0
    %p41 = por %p39, %p40
    %s42 = ssub.s32 %s8, %s15
    %p43 = scmp.eq.s32.totalorder %s42, 0
    %s45 = sadd.s32 %s44, 1
    %s46 = scalar_select %p43, %s44, %s45
    %p49 = pneg %p43
    %p50 = scmp.eq.s32.totalorder %s8, 1
    %p51 = por %p49, %p50
    %p52 = scmp.ne.s32.totalorder %s44, %s47
    %p53 = scmp.eq.s32.totalorder %s8, 0
    %p54 = por %p52, %p53
    %p55 = scmp.ne.s32.totalorder %s44, %s47
    %p56 = scmp.eq.s32.totalorder %s13, 1
    %p57 = por %p55, %p56
    %p58 = scmp.ne.s32.totalorder %s47, %s48
    %p59 = scmp.eq.s32.totalorder %s13, 0
    %p60 = por %p58, %p59
    %p61 = scmp.ne.s32.totalorder %s47, %s48
    %p62 = scmp.eq.s32.totalorder %s14, 1
    %p63 = por %p61, %p62
    %p65 = scmp.ne.s32.totalorder %s48, %s64
    %p66 = scmp.eq.s32.totalorder %s14, 0
    %p67 = por %p65, %p66
    %s68 = ssub.s32 %s8, %s15
    %p69 = scmp.eq.s32.totalorder %s68, 0
    %s71 = sadd.s32 %s70, 1
    %s72 = scalar_select %p69, %s70, %s71
    %p75 = pneg %p69
    %p76 = scmp.eq.s32.totalorder %s8, 1
    %p77 = por %p75, %p76
    %p78 = scmp.ne.s32.totalorder %s70, %s73
    %p79 = scmp.eq.s32.totalorder %s8, 0
    %p80 = por %p78, %p79
    %p81 = scmp.ne.s32.totalorder %s70, %s73
    %p82 = scmp.eq.s32.totalorder %s13, 1
    %p83 = por %p81, %p82
    %p84 = scmp.ne.s32.totalorder %s73, %s74
    %p85 = scmp.eq.s32.totalorder %s13, 0
    %p86 = por %p84, %p85
    %p87 = scmp.ne.s32.totalorder %s73, %s74
    %p88 = scmp.eq.s32.totalorder %s14, 1
    %p89 = por %p87, %p88
    %p91 = scmp.ne.s32.totalorder %s74, %s90
    %p92 = scmp.eq.s32.totalorder %s14, 0
    %p93 = por %p91, %p92
    %p94 = scmp.le.s32.totalorder 1, %s8
    %p95 = scmp.lt.s32.totalorder %s8, 3
    %p96 = pnand %p94, %p95
    %p97 = pneg %p96
    // Predicated region
    $region9: #{proposal_target_forward.2} parent=5 // pred_check
      _
    $region10: #{proposal_target_forward.2} parent=5 // pred_check_branch
      %99 = sbr.rel (%p96) target = $region12
    $region11: #{proposal_target_forward.2} parent=5 // pred_region
      %s100 = ssub.s32 %s8, 1
    $region12: #{proposal_target_forward.2} parent=5 // pred_fallthru
      _
    %p101 = scmp.lt.s32.totalorder %s8, 2
    // Predicated region
    $region13: #{proposal_target_forward.2} parent=5 // pred_check
      %p102 = pneg %p101
    $region14: #{proposal_target_forward.2} parent=5 // pred_check_branch
      %104 = sbr.rel (%p102) target = $region16
    $region15: #{proposal_target_forward.2} parent=5 // pred_region
      // Predicated region
      $region17: #{proposal_target_forward.2} parent=15 // pred_check
        %p105 = pneg %p28
      $region18: #{proposal_target_forward.2} parent=15 // pred_check_branch
        %107 = sbr.rel (%p105) target = $region20
      $region19: #{proposal_target_forward.2} parent=15 // pred_region
        %p108 = scmp.lt.s32.totalorder %s8, 1
        %s109 = scalar_select %p108, %s8, 1
        %s110 = smul.addr %s109, 4
        %s111 = scalar_lea.vmem %s0, %s110
      $region20: #{proposal_target_forward.2} parent=15 // pred_fallthru
        _
      // Predicated region
      $region21: #{proposal_target_forward.2} parent=15 // pred_check
        %p112 = pneg %p54
      $region22: #{proposal_target_forward.2} parent=15 // pred_check_branch
        %114 = sbr.rel (%p112) target = $region24
      $region23: #{proposal_target_forward.2} parent=15 // pred_region
        %p115 = scmp.lt.s32.totalorder %s8, 1
        %s116 = scalar_select %p115, %s8, 1
        %s117 = smul.addr %s116, 8
        %s118 = scalar_lea.vmem %s1, %s117
      $region24: #{proposal_target_forward.2} parent=15 // pred_fallthru
        _
    $region16: #{proposal_target_forward.2} parent=5 // pred_fallthru
      _
    %p119 = scmp.le.s32.totalorder 1, %s8
    %p120 = scmp.lt.s32.totalorder %s8, 3
    %p121 = pnand %p119, %p120
    %p122 = pneg %p121
    // Predicated region
    $region25: #{proposal_target_forward.2} parent=5 // pred_check
      _
    $region26: #{proposal_target_forward.2} parent=5 // pred_check_branch
      %124 = sbr.rel (%p121) target = $region28
    $region27: #{proposal_target_forward.2} parent=5 // pred_region
      %s125 = ssub.s32 %s8, 1
      %p126 = scmp.lt.s32.totalorder %s13, 1
      %s127 = scalar_select %p126, %s13, 1
      %s128 = smul.addr %s127, 4
      %s129 = scalar_lea.vmem %s0, %s128
      %p130 = pneg %p34
      %p131 = pneg %p31
      %p132 = scmp.lt.s32.totalorder %s13, 1
      %s133 = scalar_select %p132, %s13, 1
      %s134 = smul.addr %s133, 8
      %s135 = scalar_lea.vmem %s1, %s134
      %p136 = pneg %p60
      %p137 = pneg %p57
      %p138 = pneg %p86
      %p139 = pneg %p83
      %p140 = scmp.lt.s32.totalorder %s13, 1
      %s141 = scalar_select %p140, %s13, 1
      %s142 = smul.addr %s141, 4
      %s143 = scalar_lea.vmem %s2, %s142
      %p144 = scmp.lt.s32.totalorder %s13, 1
      %s145 = scalar_select %p144, %s13, 1
      %s146 = smul.addr %s145, 4
      %s147 = scalar_lea.vmem %s0, %s146
      %p148 = scmp.lt.s32.totalorder %s13, 1
      %s149 = scalar_select %p148, %s13, 1
      %s150 = smul.addr %s149, 8
      %s151 = scalar_lea.vmem %s1, %s150
      %p152 = scmp.lt.s32.totalorder %s13, 1
      %s153 = scalar_select %p152, %s13, 1
      %s154 = smul.addr %s153, 4
      %s155 = scalar_lea.vmem %s2, %s154
      %v156 = vld [vmem:[%s147] sm:$0xf]
      %v157 = vld [vmem:[%s151] sm:$0xff]
      %v159 = vrot.slane %v156, 6
      %v161 = vsub.f32 %v156, %v159
      %v162 = vadd.f32 %v161, 1.0
      %v164 = vrot.slane %v162, 1
      %v166 = vmul.f32 %v162, %v164
      %vm167 = vcmp.eq.f32.partialorder %v162, 1.0
      %v168 = vsel %vm167, 1, 0
      %v169 = vrot.slane %v168, 1
      %vm170 = vcmp.ne.s32.totalorder %v169, 0
      %vm171 = vmand %vm167, %vm170
      %173 = vrot.lane.b32.xlu0 %v157, 2
      %v174 = vpop.permute.xlu0 %173
      %v176 = vsub.f32 %v157, %v174
      %v177 = vadd.f32 %v176, 1.0
      %179 = vrot.lane.b32.xlu0 %v177, 127
      %v180 = vpop.permute.xlu0 %179
      %v182 = vmul.f32 %v177, %v180
      %vm183 = vcmp.eq.f32.partialorder %v177, 1.0
      %v184 = vsel %vm183, 1, 0
      %185 = vrot.lane.b32.xlu0 %v184, 127
      %v186 = vpop.permute.xlu0 %185
      %vm187 = vcmp.ne.s32.totalorder %v186, 0
      %vm188 = vmand %vm183, %vm187
      %v189 = vperm.slane %v156, 2
      %190 = vset.pattern.permute.xlu0 2
      %191 = vperm.xlu0 %190, %v157
      %v192 = vpop.permute.xlu0 %191
      %v194 = vmin.f32 %v189, %v192
      %v195 = vperm.slane %v156, 0
      %196 = vset.pattern.permute.xlu0 0
      %197 = vperm.xlu0 %196, %v157
      %v198 = vpop.permute.xlu0 %197
      %v200 = vmax.f32 %v195, %v198
      %v201 = vsub.f32 %v194, %v200
      %v202 = vadd.f32 %v201, 1.0
      %v203 = vmax.f32 %v202, 0.0
      %v204 = vperm.slane %v156, 3
      %205 = vset.pattern.permute.xlu0 3
      %206 = vperm.xlu0 %205, %v157
      %v207 = vpop.permute.xlu0 %206
      %v209 = vmin.f32 %v204, %v207
      %v210 = vperm.slane %v156, 1
      %211 = vset.pattern.permute.xlu0 1
      %212 = vperm.xlu0 %211, %v157
      %v213 = vpop.permute.xlu0 %212
      %v215 = vmax.f32 %v210, %v213
      %v216 = vsub.f32 %v209, %v215
      %v217 = vadd.f32 %v216, 1.0
      %v218 = vmax.f32 %v217, 0.0
      %v219 = vmul.f32 %v203, %v218
      %v220 = vperm.slane %v166, 2
      %222 = vset.pattern.permute.xlu0 2
      %223 = vperm.xlu0 %222, %v182
      %v224 = vpop.permute.xlu0 %223
      %v226 = vadd.f32 %v220, %v224
      %v227 = vsub.f32 %v226, %v219
      %v228 = vmax.f32 %v227, 1e-06
      %v229 = vrcp.pop %v228
      %v230 = vmul.f32 %v228, %v229
      %v231 = vsub.f32 1.0, %v230
      %v232 = vmul.f32 %v229, %v231
      %v233 = vadd.f32 %v229, %v232
      %vm234 = vweird.f32 %v228
      %vm235 = vweird.f32 %v229
      %vm236 = vmor %vm234, %vm235
      %v237 = vsel %vm236, %v229, %v233
      %v238 = vand.u32 2147483647, %v228
      %vm239 = vcmp.eq.f32.partialorder %v238, 8.507059e+37
      %v240 = vand.u32 %v228, 2147483648
      %v241 = vor.u32 1.1754944e-38, %v240
      %v242 = vsel %vm239, %v241, %v237
      %v243 = vmul.f32 %v219, %v242
      %v244 = vsel %vm188, 1, 0
      %245 = vset.pattern.permute.xlu0 2
      %246 = vperm.xlu0 %245, %v244
      %v247 = vpop.permute.xlu0 %246
      %vm248 = vcmp.eq.s32.totalorder %v247, 1
      %v249 = vsel %vm248, 0.0, %v243
      %v250 = vsel %vm171, 1, 0
      %v251 = vperm.slane %v250, 2
      %vm252 = vcmp.eq.s32.totalorder %v251, 1
      %v253 = vsel %vm252, -1.0, %v249
      %v254 = vrot.slane %v253, 4
      %v255 = vmax.f32 %v253, %v254
      %v256 = vrot.slane %v255, 2
      %v257 = vmax.f32 %v255, %v256
      %v258 = vrot.slane %v257, 1
      %v259 = vmax.f32 %v257, %v258
      %v260 = vlaneseq
      %v261 = vshrl.u32 %v260, 7
      %vm262 = vcmp.ge.f32.partialorder %v253, %v259
      %v263 = vsel %vm262, %v261, 8
      %v264 = vrot.slane %v263, 4
      %vm265 = vcmp.lt.s32.totalorder %v263, %v264
      %v266 = vsel %vm265, %v263, %v264
      %v267 = vrot.slane %v266, 2
      %vm268 = vcmp.lt.s32.totalorder %v266, %v267
      %v269 = vsel %vm268, %v266, %v267
      %v270 = vrot.slane %v269, 1
      %vm271 = vcmp.lt.s32.totalorder %v269, %v270
      %v272 = vsel %vm271, %v269, %v270
      %vm273 = vcmp.eq.s32.totalorder %v261, %v272
      %v274 = vsel %vm273, 1, 0
      %v275 = vcvt.s32.f32 %v274
      %276 = vset.pattern.permute.xlu0 4
      %277 = vperm.xlu0 %276, %v157
      %v278 = vpop.permute.xlu0 %277
      %v280 = vmul.f32 %v275, %v278
      %v281 = vrot.slane %v280, 4
      %v282 = vadd.f32 %v280, %v281
      %v283 = vrot.slane %v282, 2
      %v284 = vadd.f32 %v282, %v283
      %v285 = vrot.slane %v284, 1
      %v286 = vadd.f32 %v284, %v285
      %287 = vst [vmem:[%s155] sm:$0x1] %v259
      %288 = vst [vmem:[%s155 + $0x1] sm:$0x1] %v286
      %v289 = vcvt.s32.f32 %v272
      %290 = vst [vmem:[%s155 + $0x2] sm:$0x1] %v289
      %p291 = scmp.lt.s32.totalorder %s13, 1
      %s292 = scalar_select %p291, %s13, 1
      %s293 = smul.addr %s292, 4
      %s294 = scalar_lea.vmem %s2, %s293
      // Predicated region
      $region29: #{proposal_target_forward.2} parent=27 // pred_check
        %p295 = pneg %p83
      $region30: #{proposal_target_forward.2} parent=27 // pred_check_branch
        %297 = sbr.rel (%p295) target = $region32
      $region31: #{proposal_target_forward.2} parent=27 // pred_region
        _
      $region32: #{proposal_target_forward.2} parent=27 // pred_fallthru
        _
    $region28: #{proposal_target_forward.2} parent=5 // pred_fallthru
      _
    %p298 = scmp.le.s32.totalorder 2, %s8
    // Predicated region
    $region33: #{proposal_target_forward.2} parent=5 // pred_check
      %p299 = pneg %p298
    $region34: #{proposal_target_forward.2} parent=5 // pred_check_branch
      %301 = sbr.rel (%p299) target = $region36
    $region35: #{proposal_target_forward.2} parent=5 // pred_region
      %s302 = ssub.s32 %s8, 2
      // Predicated region
      $region37: #{proposal_target_forward.2} parent=35 // pred_check
        %p303 = pneg %p89
      $region38: #{proposal_target_forward.2} parent=35 // pred_check_branch
        %305 = sbr.rel (%p303) target = $region40
      $region39: #{proposal_target_forward.2} parent=35 // pred_region
        %p306 = scmp.lt.s32.totalorder %s14, 1
        %s307 = scalar_select %p306, %s14, 1
        %s308 = smul.addr %s307, 4
        %s309 = scalar_lea.vmem %s2, %s308
      $region40: #{proposal_target_forward.2} parent=35 // pred_fallthru
        _
    $region36: #{proposal_target_forward.2} parent=5 // pred_fallthru
      _
  $region6: #{proposal_target_forward.2} parent=0 // loop_footer
    %s12 = sadd.s32 1, %s8
  $region7: #{proposal_target_forward.2} parent=0 // loop_footer_branch
    %7 = sbr.rel target = $region3
  $region8: #{proposal_target_forward.2} parent=0 // loop_exit
    _

// kernel: proposal_target_forward.3
$region0: #{proposal_target_forward.3}
  #allocation0 [shape = 'u32[]', space=smem, size = 0x4, offset = 0x4, fixed_abs, tag = 'smem constant byte address 0x4 - core index']
  #allocation1 [shape = 'u32[72,128]{1,0:T(1,128)}', space=vmem, size = 0x9000, scoped, tag = 'internal scratch']
  %s0 = inlined_call_operand.vmem [shape: f32[4,128], index: 0, kind: input, shape index: {}]
  %s1 = inlined_call_operand.vmem [shape: f32[4,128], index: 1, kind: input, shape index: {}]
  %s2 = inlined_call_operand.vmem [shape: f32[1,128], index: 2, kind: input, shape index: {}]
  %s3 = inlined_call_operand.vmem [shape: f32[12,128], index: 3, kind: output, shape index: {}]
  %s4 = sld [smem:[#allocation0]]
  $region22: #{proposal_target_forward.3} parent=0
    _
  %s6 = ssub.s32 1, %s4
  %s7 = scalar_select 0, %s6, %s4
  // Predicated region
  $region2: #{proposal_target_forward.3} parent=0 // pred_check
    _
  $region3: #{proposal_target_forward.3} parent=0 // pred_check_branch
    %9 = sbr.rel (0) target = $region5
  $region4: #{proposal_target_forward.3} parent=0 // pred_region
    _
  $region5: #{proposal_target_forward.3} parent=0 // pred_fallthru
    _
  // Predicated region
  $region6: #{proposal_target_forward.3} parent=0 // pred_check
    _
  $region7: #{proposal_target_forward.3} parent=0 // pred_check_branch
    %11 = sbr.rel (0) target = $region9
  $region8: #{proposal_target_forward.3} parent=0 // pred_region
    _
  $region9: #{proposal_target_forward.3} parent=0 // pred_fallthru
    _
  // Predicated region
  $region10: #{proposal_target_forward.3} parent=0 // pred_check
    _
  $region11: #{proposal_target_forward.3} parent=0 // pred_check_branch
    %13 = sbr.rel (0) target = $region13
  $region12: #{proposal_target_forward.3} parent=0 // pred_region
    _
  $region13: #{proposal_target_forward.3} parent=0 // pred_fallthru
    _
  %v14 = vld [vmem:[%s0] sm:$0xf]
  %v15 = vld [vmem:[%s1] sm:$0xf]
  %v16 = vld [vmem:[%s2] sm:$0x1]
  %vm17 = vcmp.gt.f32.partialorder %v16, 0.0
  %v19 = vrot.slane %v14, 6
  %v21 = vsub.f32 %v14, %v19
  %v22 = vadd.f32 %v21, 1.0
  %v23 = vmax.f32 %v22, 1e-06
  %v25 = vrot.slane %v15, 6
  %v27 = vsub.f32 %v15, %v25
  %v28 = vadd.f32 %v27, 1.0
  %v29 = vmax.f32 %v28, 1e-06
  %v30 = vmul.f32 %v23, 0.5
  %v32 = vrot.slane %v30, 2
  %v34 = vadd.f32 %v14, %v32
  %v35 = vmul.f32 %v29, 0.5
  %v37 = vrot.slane %v35, 2
  %v39 = vadd.f32 %v15, %v37
  %v40 = vsub.f32 %v39, %v34
  %v42 = vrot.slane %v23, 2
  %v44 = vrcp.pop %v42
  %v45 = vmul.f32 %v42, %v44
  %v46 = vsub.f32 1.0, %v45
  %v47 = vmul.f32 %v44, %v46
  %v48 = vadd.f32 %v44, %v47
  %vm49 = vweird.f32 %v42
  %vm50 = vweird.f32 %v44
  %vm51 = vmor %vm49, %vm50
  %v52 = vsel %vm51, %v44, %v48
  %v53 = vand.u32 2147483647, %v42
  %vm54 = vcmp.eq.f32.partialorder %v53, 8.507059e+37
  %v55 = vand.u32 %v42, 2147483648
  %v56 = vor.u32 1.1754944e-38, %v55
  %v57 = vsel %vm54, %v56, %v52
  %v58 = vmul.f32 %v40, %v57
  %v59 = vrcp.pop %v23
  %v60 = vmul.f32 %v23, %v59
  %v61 = vsub.f32 1.0, %v60
  %v62 = vmul.f32 %v59, %v61
  %v63 = vadd.f32 %v59, %v62
  %vm64 = vweird.f32 %v23
  %vm65 = vweird.f32 %v59
  %vm66 = vmor %vm64, %vm65
  %v67 = vsel %vm66, %v59, %v63
  %v68 = vand.u32 2147483647, %v23
  %vm69 = vcmp.eq.f32.partialorder %v68, 8.507059e+37
  %v70 = vand.u32 %v23, 2147483648
  %v71 = vor.u32 1.1754944e-38, %v70
  %v72 = vsel %vm69, %v71, %v67
  %v73 = vmul.f32 %v29, %v72
  %v74 = vlog2.pop %v73
  %v75 = vmul.f32 %v74, 0.6931472
  %v76 = vmul.f32 %v58, 10.0
  %v77 = vmul.f32 %v75, 5.0
  %v78 = vsel %vm17, 1, 0
  %v79 = vperm.slane %v78, 0
  %vm80 = vcmp.eq.s32.totalorder %v79, 1
  %v81 = vsel %vm80, %v76, 0.0
  %82 = vst [vmem:[%s3] sm:$0x3] %v81
  %v83 = vsel %vm80, %v77, 0.0
  %84 = vst [vmem:[%s3] sm:$0xc] %v83
  %v85 = vsel %vm17, 1.0, 0.0
  %v87 = vperm.slane %v85, 0
  %89 = vst [vmem:[%s3 + $0x4] sm:$0xf] %v87
  %90 = vst [vmem:[%s3 + $0x8] sm:$0xf] %v87
  // Predicated region
  $region14: #{proposal_target_forward.3} parent=0 // pred_check
    _
  $region15: #{proposal_target_forward.3} parent=0 // pred_check_branch
    %92 = sbr.rel (0) target = $region17
  $region16: #{proposal_target_forward.3} parent=0 // pred_region
    _
  $region17: #{proposal_target_forward.3} parent=0 // pred_fallthru
    _
  // Predicated region
  $region18: #{proposal_target_forward.3} parent=0 // pred_check
    _
  $region19: #{proposal_target_forward.3} parent=0 // pred_check_branch
    %94 = sbr.rel (0) target = $region21
  $region20: #{proposal_target_forward.3} parent=0 // pred_region
    _
  $region21: #{proposal_target_forward.3} parent=0 // pred_fallthru
    _

</llo_original>
